<compile_context>
chip_gen: v7x
topology: tpu7x:2x2x1
jax: 0.10.0
libtpu: 0.0.40
codegen_flags: <defaults>
</compile_context>

<pallas_src>
import functools

import jax
import jax.numpy as jnp
from jax.experimental import pallas as pl
from jax.experimental.pallas import tpu as pltpu

# Small, deterministic test shapes consistent with the module's forward.
BATCH_SIZE = 8
EMBEDDING_DIM = 16
CHARACTER_SET_SIZE = 64
N_LAYERS = 1          # forward's .view(BATCH_SIZE, -1) into Linear(hidden_dim, ...)
                      # is only shape-consistent for n_layers == 1
HIDDEN_DIM = 32
N_CLASSES = 10
SEQ_LEN = 8

LANE = 128            # lane-dense padding for the classifier head
NEG_PAD = -1e30       # finite in f32; exp() underflows to 0 inside log_softmax


def lstm_head_kernel(idx_ref, table_ref, whh_ref, wout_ref, bout_ref, out_ref,
                     *, seq_len, batch, hidden_dim, vocab):
    """Single invocation: in-kernel gather + unrolled LSTM recurrence + classifier head."""
    T, B, H, V = seq_len, batch, hidden_dim, vocab

    # In-kernel embedding gather fused with the input-to-hidden projection:
    # one_hot(idx) @ table, where table = Emb @ W_ih^T + (b_ih + b_hh)
    # (g-gate columns of table/W_hh pre-scaled by 2 offline for the tanh-via-sigmoid rewrite).
    idx = idx_ref[...]                                                # (T*B, 1) int32
    lane_iota = jax.lax.broadcasted_iota(jnp.int32, (T * B, V), 1)
    onehot = (lane_iota == idx).astype(jnp.float32)                   # (T*B, V) exact 0/1
    gx = jnp.dot(onehot, table_ref[...],
                 preferred_element_type=jnp.float32)                  # (T*B, 4H)

    whh = whh_ref[...]                                                # (H, 4H)

    h = jnp.zeros((B, H), jnp.float32)
    c = jnp.zeros((B, H), jnp.float32)

    # Statically unrolled, strictly serial recurrence: one (B,H)@(H,4H) MXU matmul,
    # one full-vreg sigmoid and one small tanh per step.
    for t in range(T):
        gates = gx[t * B:(t + 1) * B, :] + jnp.dot(
            h, whh, preferred_element_type=jnp.float32)               # (B, 4H), order i|f|g|o
        sig = jax.nn.sigmoid(gates)                                   # single EUP pass per step
        i_g = sig[:, 0 * H:1 * H]
        f_g = sig[:, 1 * H:2 * H]
        g_g = sig[:, 2 * H:3 * H] * 2.0 - 1.0                         # tanh(x) = 2*sigmoid(2x)-1
        o_g = sig[:, 3 * H:4 * H]
        c = f_g * c + i_g * g_g
        h = o_g * jnp.tanh(c)

    # Output head: Linear (lane-padded to 128 classes) + log_softmax.
    # Padded columns have weight 0 and bias NEG_PAD -> exp underflows to 0 in the sum.
    logits = jnp.dot(h, wout_ref[...], preferred_element_type=jnp.float32) + bout_ref[...]
    m = jnp.max(logits, axis=-1, keepdims=True)
    shifted = logits - m
    lse = jnp.log(jnp.sum(jnp.exp(shifted), axis=-1, keepdims=True))
    out_ref[...] = shifted - lse


def prepare_params(params):
    """One-time parameter preprocessing (hoisted out of the forward path)."""
    H, C = HIDDEN_DIM, N_CLASSES

    # Scale applied to the g-gate (cell candidate) columns so the kernel can use
    # tanh(x) = 2*sigmoid(2x) - 1 with a single sigmoid over the full gates vreg.
    g_scale = jnp.ones((4 * H,), jnp.float32).at[2 * H:3 * H].set(2.0)

    b_lstm = params["b_ih"] + params["b_hh"]                                    # (4H,)
    # Fused Embedding + input projection lookup table: (V, 4H), lane-dense.
    table = (params["emb"] @ params["w_ih"].T + b_lstm) * g_scale               # (V, 4H)
    whh_t = params["w_hh"].T * g_scale                                          # (H, 4H)

    # Lane-dense classifier head: pad classes to 128.
    w_out_pad = jnp.zeros((H, LANE), jnp.float32).at[:, :C].set(params["w_out"].T)
    b_out_pad = jnp.full((1, LANE), NEG_PAD, jnp.float32).at[0, :C].set(params["b_out"])

    return {
        "table": table,
        "whh": whh_t,
        "w_out": w_out_pad,
        "b_out": b_out_pad,
    }


def _forward(inputs, prepped):
    """inputs: (T, B) int32; returns (B, n_classes) f32 log-probabilities."""
    T, B = inputs.shape
    C = N_CLASSES

    idx = inputs.reshape(T * B, 1).astype(jnp.int32)   # time-major row order t0b0, t0b1, ...

    kernel = functools.partial(lstm_head_kernel, seq_len=T, batch=B,
                               hidden_dim=HIDDEN_DIM, vocab=CHARACTER_SET_SIZE)
    vmem_spec = pl.BlockSpec(memory_space=pltpu.MemorySpace.VMEM)
    out_pad = pl.pallas_call(
        kernel,
        out_shape=jax.ShapeDtypeStruct((B, LANE), jnp.float32),
        in_specs=[vmem_spec] * 5,
        out_specs=vmem_spec,
    )(idx, prepped["table"], prepped["whh"], prepped["w_out"], prepped["b_out"])

    return out_pad[:, :C]


gru_model_forward = jax.jit(_forward)


def init_params(key):
    """Deterministic parameter init mirroring the PyTorch module's shapes."""
    E, H, C, V = EMBEDDING_DIM, HIDDEN_DIM, N_CLASSES, CHARACTER_SET_SIZE
    k = jax.random.split(key, 7)
    s_lstm = 1.0 / jnp.sqrt(H)
    s_lin = 1.0 / jnp.sqrt(H)
    return {
        "emb": jax.random.normal(k[0], (V, E), jnp.float32),                       # Embedding: N(0,1)
        "w_ih": jax.random.uniform(k[1], (4 * H, E), jnp.float32, -s_lstm, s_lstm),
        "w_hh": jax.random.uniform(k[2], (4 * H, H), jnp.float32, -s_lstm, s_lstm),
        "b_ih": jax.random.uniform(k[3], (4 * H,), jnp.float32, -s_lstm, s_lstm),
        "b_hh": jax.random.uniform(k[4], (4 * H,), jnp.float32, -s_lstm, s_lstm),
        "w_out": jax.random.uniform(k[5], (C, H), jnp.float32, -s_lin, s_lin),
        "b_out": jax.random.uniform(k[6], (C,), jnp.float32, -s_lin, s_lin),
    }


def reference_forward(inputs, params):
    """Pure-JAX reference for validation (matches torch LSTM gate math)."""
    H = HIDDEN_DIM
    embeds = jnp.take(params["emb"], inputs, axis=0).astype(jnp.float32)  # (T, B, E)
    B = inputs.shape[1]
    h0 = jnp.zeros((B, H), jnp.float32)
    c0 = jnp.zeros((B, H), jnp.float32)

    def step(carry, x_t):
        h, c = carry
        gates = (x_t @ params["w_ih"].T + params["b_ih"]
                 + h @ params["w_hh"].T + params["b_hh"])
        i = jax.nn.sigmoid(gates[:, 0 * H:1 * H])
        f = jax.nn.sigmoid(gates[:, 1 * H:2 * H])
        g = jnp.tanh(gates[:, 2 * H:3 * H])
        o = jax.nn.sigmoid(gates[:, 3 * H:4 * H])
        c_new = f * c + i * g
        h_new = o * jnp.tanh(c_new)
        return (h_new, c_new), None

    (h_n, _), _ = jax.lax.scan(step, (h0, c0), embeds)
    logits = h_n @ params["w_out"].T + params["b_out"]
    return jax.nn.log_softmax(logits, axis=1)


if __name__ == "__main__":
    key = jax.random.PRNGKey(0)
    pkey, ikey = jax.random.split(key)
    params = init_params(pkey)
    prepped = jax.tree_util.tree_map(jax.block_until_ready, prepare_params(params))

    # inputs: (T, B) = (SEQ_LEN, BATCH_SIZE) integer character indices (time-major)
    inputs = jax.random.randint(ikey, (SEQ_LEN, BATCH_SIZE), 0, CHARACTER_SET_SIZE,
                                dtype=jnp.int32)

    out = gru_model_forward(inputs, prepped)
    out = jax.block_until_ready(out)

    ref = jax.block_until_ready(reference_forward(inputs, params))
    assert out.shape == (BATCH_SIZE, N_CLASSES)
    assert jnp.allclose(out, ref, atol=1e-4, rtol=1e-4), "mismatch vs pure-JAX reference"

    print("KERNEL_OK")
</pallas_src>

<mosaic_0001>
module attributes {stable_mosaic.version = 11 : i64} {
  func.func @lstm_head_kernel(%arg0: memref<64x1xi32, #tpu.memory_space<vmem>>, %arg1: memref<64x128xf32, #tpu.memory_space<vmem>>, %arg2: memref<32x128xf32, #tpu.memory_space<vmem>>, %arg3: memref<32x128xf32, #tpu.memory_space<vmem>>, %arg4: memref<1x128xf32, #tpu.memory_space<vmem>>, %arg5: memref<8x128xf32, #tpu.memory_space<vmem>>) attributes {dimension_semantics = [], scalar_prefetch = 0 : i64, scratch_operands = 0 : i64, tpu.core_type = #tpu.core_type<tc>} {
    %c0 = arith.constant 0 : index
    %c0_0 = arith.constant 0 : index
    %0 = vector.load %arg0[%c0, %c0_0] : memref<64x1xi32, #tpu.memory_space<vmem>>, vector<64x1xi32>
    %1 = tpu.iota {dimensions = array<i32: 1>} : vector<64x64xi32>
    %2 = vector.broadcast %0 : vector<64x1xi32> to vector<64x64xi32>
    %3 = arith.cmpi eq, %1, %2 : vector<64x64xi32>
    %4 = arith.extui %3 : vector<64x64xi1> to vector<64x64xi32>
    %5 = arith.sitofp %4 : vector<64x64xi32> to vector<64x64xf32>
    %c0_1 = arith.constant 0 : index
    %c0_2 = arith.constant 0 : index
    %6 = vector.load %arg1[%c0_1, %c0_2] : memref<64x128xf32, #tpu.memory_space<vmem>>, vector<64x128xf32>
    %cst = arith.constant dense<0.000000e+00> : vector<64x128xf32>
    %7 = tpu.matmul %5, %6, %cst {dimension_numbers = #tpu.dot_dimension_numbers<[1], [0], [0], [1], [0, 0, 1, 1], [], []>} : vector<64x64xf32>, vector<64x128xf32>, vector<64x128xf32> -> vector<64x128xf32>
    %c0_3 = arith.constant 0 : index
    %c0_4 = arith.constant 0 : index
    %8 = vector.load %arg2[%c0_3, %c0_4] : memref<32x128xf32, #tpu.memory_space<vmem>>, vector<32x128xf32>
    %cst_5 = arith.constant 0.000000e+00 : f32
    %9 = vector.broadcast %cst_5 : f32 to vector<8x32xf32>
    %cst_6 = arith.constant 0.000000e+00 : f32
    %10 = vector.broadcast %cst_6 : f32 to vector<8x32xf32>
    %11 = vector.extract_strided_slice %7 {offsets = [0, 0], sizes = [8, 128], strides = [1, 1]} : vector<64x128xf32> to vector<8x128xf32>
    %cst_7 = arith.constant dense<0.000000e+00> : vector<8x128xf32>
    %12 = tpu.matmul %9, %8, %cst_7 {dimension_numbers = #tpu.dot_dimension_numbers<[1], [0], [0], [1], [0, 0, 1, 1], [], []>} : vector<8x32xf32>, vector<32x128xf32>, vector<8x128xf32> -> vector<8x128xf32>
    %13 = arith.addf %11, %12 : vector<8x128xf32>
    %14 = arith.negf %13 : vector<8x128xf32>
    %15 = math.exp %14 : vector<8x128xf32>
    %cst_8 = arith.constant 1.000000e+00 : f32
    %16 = vector.broadcast %cst_8 : f32 to vector<8x128xf32>
    %17 = arith.addf %16, %15 : vector<8x128xf32>
    %18 = arith.divf %16, %17 : vector<8x128xf32>
    %19 = vector.extract_strided_slice %18 {offsets = [0, 0], sizes = [8, 32], strides = [1, 1]} : vector<8x128xf32> to vector<8x32xf32>
    %20 = vector.extract_strided_slice %18 {offsets = [0, 32], sizes = [8, 32], strides = [1, 1]} : vector<8x128xf32> to vector<8x32xf32>
    %21 = vector.extract_strided_slice %18 {offsets = [0, 64], sizes = [8, 32], strides = [1, 1]} : vector<8x128xf32> to vector<8x32xf32>
    %cst_9 = arith.constant 2.000000e+00 : f32
    %22 = vector.broadcast %cst_9 : f32 to vector<8x32xf32>
    %23 = arith.mulf %21, %22 : vector<8x32xf32>
    %cst_10 = arith.constant 1.000000e+00 : f32
    %24 = vector.broadcast %cst_10 : f32 to vector<8x32xf32>
    %25 = arith.subf %23, %24 : vector<8x32xf32>
    %26 = vector.extract_strided_slice %18 {offsets = [0, 96], sizes = [8, 32], strides = [1, 1]} : vector<8x128xf32> to vector<8x32xf32>
    %27 = arith.mulf %20, %10 : vector<8x32xf32>
    %28 = arith.mulf %19, %25 : vector<8x32xf32>
    %29 = arith.addf %27, %28 : vector<8x32xf32>
    %30 = math.tanh %29 : vector<8x32xf32>
    %31 = arith.mulf %26, %30 : vector<8x32xf32>
    %32 = vector.extract_strided_slice %7 {offsets = [8, 0], sizes = [8, 128], strides = [1, 1]} : vector<64x128xf32> to vector<8x128xf32>
    %cst_11 = arith.constant dense<0.000000e+00> : vector<8x128xf32>
    %33 = tpu.matmul %31, %8, %cst_11 {dimension_numbers = #tpu.dot_dimension_numbers<[1], [0], [0], [1], [0, 0, 1, 1], [], []>} : vector<8x32xf32>, vector<32x128xf32>, vector<8x128xf32> -> vector<8x128xf32>
    %34 = arith.addf %32, %33 : vector<8x128xf32>
    %35 = arith.negf %34 : vector<8x128xf32>
    %36 = math.exp %35 : vector<8x128xf32>
    %cst_12 = arith.constant 1.000000e+00 : f32
    %37 = vector.broadcast %cst_12 : f32 to vector<8x128xf32>
    %38 = arith.addf %37, %36 : vector<8x128xf32>
    %39 = arith.divf %37, %38 : vector<8x128xf32>
    %40 = vector.extract_strided_slice %39 {offsets = [0, 0], sizes = [8, 32], strides = [1, 1]} : vector<8x128xf32> to vector<8x32xf32>
    %41 = vector.extract_strided_slice %39 {offsets = [0, 32], sizes = [8, 32], strides = [1, 1]} : vector<8x128xf32> to vector<8x32xf32>
    %42 = vector.extract_strided_slice %39 {offsets = [0, 64], sizes = [8, 32], strides = [1, 1]} : vector<8x128xf32> to vector<8x32xf32>
    %cst_13 = arith.constant 2.000000e+00 : f32
    %43 = vector.broadcast %cst_13 : f32 to vector<8x32xf32>
    %44 = arith.mulf %42, %43 : vector<8x32xf32>
    %cst_14 = arith.constant 1.000000e+00 : f32
    %45 = vector.broadcast %cst_14 : f32 to vector<8x32xf32>
    %46 = arith.subf %44, %45 : vector<8x32xf32>
    %47 = vector.extract_strided_slice %39 {offsets = [0, 96], sizes = [8, 32], strides = [1, 1]} : vector<8x128xf32> to vector<8x32xf32>
    %48 = arith.mulf %41, %29 : vector<8x32xf32>
    %49 = arith.mulf %40, %46 : vector<8x32xf32>
    %50 = arith.addf %48, %49 : vector<8x32xf32>
    %51 = math.tanh %50 : vector<8x32xf32>
    %52 = arith.mulf %47, %51 : vector<8x32xf32>
    %53 = vector.extract_strided_slice %7 {offsets = [16, 0], sizes = [8, 128], strides = [1, 1]} : vector<64x128xf32> to vector<8x128xf32>
    %cst_15 = arith.constant dense<0.000000e+00> : vector<8x128xf32>
    %54 = tpu.matmul %52, %8, %cst_15 {dimension_numbers = #tpu.dot_dimension_numbers<[1], [0], [0], [1], [0, 0, 1, 1], [], []>} : vector<8x32xf32>, vector<32x128xf32>, vector<8x128xf32> -> vector<8x128xf32>
    %55 = arith.addf %53, %54 : vector<8x128xf32>
    %56 = arith.negf %55 : vector<8x128xf32>
    %57 = math.exp %56 : vector<8x128xf32>
    %cst_16 = arith.constant 1.000000e+00 : f32
    %58 = vector.broadcast %cst_16 : f32 to vector<8x128xf32>
    %59 = arith.addf %58, %57 : vector<8x128xf32>
    %60 = arith.divf %58, %59 : vector<8x128xf32>
    %61 = vector.extract_strided_slice %60 {offsets = [0, 0], sizes = [8, 32], strides = [1, 1]} : vector<8x128xf32> to vector<8x32xf32>
    %62 = vector.extract_strided_slice %60 {offsets = [0, 32], sizes = [8, 32], strides = [1, 1]} : vector<8x128xf32> to vector<8x32xf32>
    %63 = vector.extract_strided_slice %60 {offsets = [0, 64], sizes = [8, 32], strides = [1, 1]} : vector<8x128xf32> to vector<8x32xf32>
    %cst_17 = arith.constant 2.000000e+00 : f32
    %64 = vector.broadcast %cst_17 : f32 to vector<8x32xf32>
    %65 = arith.mulf %63, %64 : vector<8x32xf32>
    %cst_18 = arith.constant 1.000000e+00 : f32
    %66 = vector.broadcast %cst_18 : f32 to vector<8x32xf32>
    %67 = arith.subf %65, %66 : vector<8x32xf32>
    %68 = vector.extract_strided_slice %60 {offsets = [0, 96], sizes = [8, 32], strides = [1, 1]} : vector<8x128xf32> to vector<8x32xf32>
    %69 = arith.mulf %62, %50 : vector<8x32xf32>
    %70 = arith.mulf %61, %67 : vector<8x32xf32>
    %71 = arith.addf %69, %70 : vector<8x32xf32>
    %72 = math.tanh %71 : vector<8x32xf32>
    %73 = arith.mulf %68, %72 : vector<8x32xf32>
    %74 = vector.extract_strided_slice %7 {offsets = [24, 0], sizes = [8, 128], strides = [1, 1]} : vector<64x128xf32> to vector<8x128xf32>
    %cst_19 = arith.constant dense<0.000000e+00> : vector<8x128xf32>
    %75 = tpu.matmul %73, %8, %cst_19 {dimension_numbers = #tpu.dot_dimension_numbers<[1], [0], [0], [1], [0, 0, 1, 1], [], []>} : vector<8x32xf32>, vector<32x128xf32>, vector<8x128xf32> -> vector<8x128xf32>
    %76 = arith.addf %74, %75 : vector<8x128xf32>
    %77 = arith.negf %76 : vector<8x128xf32>
    %78 = math.exp %77 : vector<8x128xf32>
    %cst_20 = arith.constant 1.000000e+00 : f32
    %79 = vector.broadcast %cst_20 : f32 to vector<8x128xf32>
    %80 = arith.addf %79, %78 : vector<8x128xf32>
    %81 = arith.divf %79, %80 : vector<8x128xf32>
    %82 = vector.extract_strided_slice %81 {offsets = [0, 0], sizes = [8, 32], strides = [1, 1]} : vector<8x128xf32> to vector<8x32xf32>
    %83 = vector.extract_strided_slice %81 {offsets = [0, 32], sizes = [8, 32], strides = [1, 1]} : vector<8x128xf32> to vector<8x32xf32>
    %84 = vector.extract_strided_slice %81 {offsets = [0, 64], sizes = [8, 32], strides = [1, 1]} : vector<8x128xf32> to vector<8x32xf32>
    %cst_21 = arith.constant 2.000000e+00 : f32
    %85 = vector.broadcast %cst_21 : f32 to vector<8x32xf32>
    %86 = arith.mulf %84, %85 : vector<8x32xf32>
    %cst_22 = arith.constant 1.000000e+00 : f32
    %87 = vector.broadcast %cst_22 : f32 to vector<8x32xf32>
    %88 = arith.subf %86, %87 : vector<8x32xf32>
    %89 = vector.extract_strided_slice %81 {offsets = [0, 96], sizes = [8, 32], strides = [1, 1]} : vector<8x128xf32> to vector<8x32xf32>
    %90 = arith.mulf %83, %71 : vector<8x32xf32>
    %91 = arith.mulf %82, %88 : vector<8x32xf32>
    %92 = arith.addf %90, %91 : vector<8x32xf32>
    %93 = math.tanh %92 : vector<8x32xf32>
    %94 = arith.mulf %89, %93 : vector<8x32xf32>
    %95 = vector.extract_strided_slice %7 {offsets = [32, 0], sizes = [8, 128], strides = [1, 1]} : vector<64x128xf32> to vector<8x128xf32>
    %cst_23 = arith.constant dense<0.000000e+00> : vector<8x128xf32>
    %96 = tpu.matmul %94, %8, %cst_23 {dimension_numbers = #tpu.dot_dimension_numbers<[1], [0], [0], [1], [0, 0, 1, 1], [], []>} : vector<8x32xf32>, vector<32x128xf32>, vector<8x128xf32> -> vector<8x128xf32>
    %97 = arith.addf %95, %96 : vector<8x128xf32>
    %98 = arith.negf %97 : vector<8x128xf32>
    %99 = math.exp %98 : vector<8x128xf32>
    %cst_24 = arith.constant 1.000000e+00 : f32
    %100 = vector.broadcast %cst_24 : f32 to vector<8x128xf32>
    %101 = arith.addf %100, %99 : vector<8x128xf32>
    %102 = arith.divf %100, %101 : vector<8x128xf32>
    %103 = vector.extract_strided_slice %102 {offsets = [0, 0], sizes = [8, 32], strides = [1, 1]} : vector<8x128xf32> to vector<8x32xf32>
    %104 = vector.extract_strided_slice %102 {offsets = [0, 32], sizes = [8, 32], strides = [1, 1]} : vector<8x128xf32> to vector<8x32xf32>
    %105 = vector.extract_strided_slice %102 {offsets = [0, 64], sizes = [8, 32], strides = [1, 1]} : vector<8x128xf32> to vector<8x32xf32>
    %cst_25 = arith.constant 2.000000e+00 : f32
    %106 = vector.broadcast %cst_25 : f32 to vector<8x32xf32>
    %107 = arith.mulf %105, %106 : vector<8x32xf32>
    %cst_26 = arith.constant 1.000000e+00 : f32
    %108 = vector.broadcast %cst_26 : f32 to vector<8x32xf32>
    %109 = arith.subf %107, %108 : vector<8x32xf32>
    %110 = vector.extract_strided_slice %102 {offsets = [0, 96], sizes = [8, 32], strides = [1, 1]} : vector<8x128xf32> to vector<8x32xf32>
    %111 = arith.mulf %104, %92 : vector<8x32xf32>
    %112 = arith.mulf %103, %109 : vector<8x32xf32>
    %113 = arith.addf %111, %112 : vector<8x32xf32>
    %114 = math.tanh %113 : vector<8x32xf32>
    %115 = arith.mulf %110, %114 : vector<8x32xf32>
    %116 = vector.extract_strided_slice %7 {offsets = [40, 0], sizes = [8, 128], strides = [1, 1]} : vector<64x128xf32> to vector<8x128xf32>
    %cst_27 = arith.constant dense<0.000000e+00> : vector<8x128xf32>
    %117 = tpu.matmul %115, %8, %cst_27 {dimension_numbers = #tpu.dot_dimension_numbers<[1], [0], [0], [1], [0, 0, 1, 1], [], []>} : vector<8x32xf32>, vector<32x128xf32>, vector<8x128xf32> -> vector<8x128xf32>
    %118 = arith.addf %116, %117 : vector<8x128xf32>
    %119 = arith.negf %118 : vector<8x128xf32>
    %120 = math.exp %119 : vector<8x128xf32>
    %cst_28 = arith.constant 1.000000e+00 : f32
    %121 = vector.broadcast %cst_28 : f32 to vector<8x128xf32>
    %122 = arith.addf %121, %120 : vector<8x128xf32>
    %123 = arith.divf %121, %122 : vector<8x128xf32>
    %124 = vector.extract_strided_slice %123 {offsets = [0, 0], sizes = [8, 32], strides = [1, 1]} : vector<8x128xf32> to vector<8x32xf32>
    %125 = vector.extract_strided_slice %123 {offsets = [0, 32], sizes = [8, 32], strides = [1, 1]} : vector<8x128xf32> to vector<8x32xf32>
    %126 = vector.extract_strided_slice %123 {offsets = [0, 64], sizes = [8, 32], strides = [1, 1]} : vector<8x128xf32> to vector<8x32xf32>
    %cst_29 = arith.constant 2.000000e+00 : f32
    %127 = vector.broadcast %cst_29 : f32 to vector<8x32xf32>
    %128 = arith.mulf %126, %127 : vector<8x32xf32>
    %cst_30 = arith.constant 1.000000e+00 : f32
    %129 = vector.broadcast %cst_30 : f32 to vector<8x32xf32>
    %130 = arith.subf %128, %129 : vector<8x32xf32>
    %131 = vector.extract_strided_slice %123 {offsets = [0, 96], sizes = [8, 32], strides = [1, 1]} : vector<8x128xf32> to vector<8x32xf32>
    %132 = arith.mulf %125, %113 : vector<8x32xf32>
    %133 = arith.mulf %124, %130 : vector<8x32xf32>
    %134 = arith.addf %132, %133 : vector<8x32xf32>
    %135 = math.tanh %134 : vector<8x32xf32>
    %136 = arith.mulf %131, %135 : vector<8x32xf32>
    %137 = vector.extract_strided_slice %7 {offsets = [48, 0], sizes = [8, 128], strides = [1, 1]} : vector<64x128xf32> to vector<8x128xf32>
    %cst_31 = arith.constant dense<0.000000e+00> : vector<8x128xf32>
    %138 = tpu.matmul %136, %8, %cst_31 {dimension_numbers = #tpu.dot_dimension_numbers<[1], [0], [0], [1], [0, 0, 1, 1], [], []>} : vector<8x32xf32>, vector<32x128xf32>, vector<8x128xf32> -> vector<8x128xf32>
    %139 = arith.addf %137, %138 : vector<8x128xf32>
    %140 = arith.negf %139 : vector<8x128xf32>
    %141 = math.exp %140 : vector<8x128xf32>
    %cst_32 = arith.constant 1.000000e+00 : f32
    %142 = vector.broadcast %cst_32 : f32 to vector<8x128xf32>
    %143 = arith.addf %142, %141 : vector<8x128xf32>
    %144 = arith.divf %142, %143 : vector<8x128xf32>
    %145 = vector.extract_strided_slice %144 {offsets = [0, 0], sizes = [8, 32], strides = [1, 1]} : vector<8x128xf32> to vector<8x32xf32>
    %146 = vector.extract_strided_slice %144 {offsets = [0, 32], sizes = [8, 32], strides = [1, 1]} : vector<8x128xf32> to vector<8x32xf32>
    %147 = vector.extract_strided_slice %144 {offsets = [0, 64], sizes = [8, 32], strides = [1, 1]} : vector<8x128xf32> to vector<8x32xf32>
    %cst_33 = arith.constant 2.000000e+00 : f32
    %148 = vector.broadcast %cst_33 : f32 to vector<8x32xf32>
    %149 = arith.mulf %147, %148 : vector<8x32xf32>
    %cst_34 = arith.constant 1.000000e+00 : f32
    %150 = vector.broadcast %cst_34 : f32 to vector<8x32xf32>
    %151 = arith.subf %149, %150 : vector<8x32xf32>
    %152 = vector.extract_strided_slice %144 {offsets = [0, 96], sizes = [8, 32], strides = [1, 1]} : vector<8x128xf32> to vector<8x32xf32>
    %153 = arith.mulf %146, %134 : vector<8x32xf32>
    %154 = arith.mulf %145, %151 : vector<8x32xf32>
    %155 = arith.addf %153, %154 : vector<8x32xf32>
    %156 = math.tanh %155 : vector<8x32xf32>
    %157 = arith.mulf %152, %156 : vector<8x32xf32>
    %158 = vector.extract_strided_slice %7 {offsets = [56, 0], sizes = [8, 128], strides = [1, 1]} : vector<64x128xf32> to vector<8x128xf32>
    %cst_35 = arith.constant dense<0.000000e+00> : vector<8x128xf32>
    %159 = tpu.matmul %157, %8, %cst_35 {dimension_numbers = #tpu.dot_dimension_numbers<[1], [0], [0], [1], [0, 0, 1, 1], [], []>} : vector<8x32xf32>, vector<32x128xf32>, vector<8x128xf32> -> vector<8x128xf32>
    %160 = arith.addf %158, %159 : vector<8x128xf32>
    %161 = arith.negf %160 : vector<8x128xf32>
    %162 = math.exp %161 : vector<8x128xf32>
    %cst_36 = arith.constant 1.000000e+00 : f32
    %163 = vector.broadcast %cst_36 : f32 to vector<8x128xf32>
    %164 = arith.addf %163, %162 : vector<8x128xf32>
    %165 = arith.divf %163, %164 : vector<8x128xf32>
    %166 = vector.extract_strided_slice %165 {offsets = [0, 0], sizes = [8, 32], strides = [1, 1]} : vector<8x128xf32> to vector<8x32xf32>
    %167 = vector.extract_strided_slice %165 {offsets = [0, 32], sizes = [8, 32], strides = [1, 1]} : vector<8x128xf32> to vector<8x32xf32>
    %168 = vector.extract_strided_slice %165 {offsets = [0, 64], sizes = [8, 32], strides = [1, 1]} : vector<8x128xf32> to vector<8x32xf32>
    %cst_37 = arith.constant 2.000000e+00 : f32
    %169 = vector.broadcast %cst_37 : f32 to vector<8x32xf32>
    %170 = arith.mulf %168, %169 : vector<8x32xf32>
    %cst_38 = arith.constant 1.000000e+00 : f32
    %171 = vector.broadcast %cst_38 : f32 to vector<8x32xf32>
    %172 = arith.subf %170, %171 : vector<8x32xf32>
    %173 = vector.extract_strided_slice %165 {offsets = [0, 96], sizes = [8, 32], strides = [1, 1]} : vector<8x128xf32> to vector<8x32xf32>
    %174 = arith.mulf %167, %155 : vector<8x32xf32>
    %175 = arith.mulf %166, %172 : vector<8x32xf32>
    %176 = arith.addf %174, %175 : vector<8x32xf32>
    %177 = math.tanh %176 : vector<8x32xf32>
    %178 = arith.mulf %173, %177 : vector<8x32xf32>
    %c0_39 = arith.constant 0 : index
    %c0_40 = arith.constant 0 : index
    %179 = vector.load %arg3[%c0_39, %c0_40] : memref<32x128xf32, #tpu.memory_space<vmem>>, vector<32x128xf32>
    %cst_41 = arith.constant dense<0.000000e+00> : vector<8x128xf32>
    %180 = tpu.matmul %178, %179, %cst_41 {dimension_numbers = #tpu.dot_dimension_numbers<[1], [0], [0], [1], [0, 0, 1, 1], [], []>} : vector<8x32xf32>, vector<32x128xf32>, vector<8x128xf32> -> vector<8x128xf32>
    %c0_42 = arith.constant 0 : index
    %c0_43 = arith.constant 0 : index
    %181 = vector.load %arg4[%c0_42, %c0_43] : memref<1x128xf32, #tpu.memory_space<vmem>>, vector<1x128xf32>
    %182 = vector.broadcast %181 : vector<1x128xf32> to vector<8x128xf32>
    %183 = arith.addf %180, %182 : vector<8x128xf32>
    %cst_44 = arith.constant dense<0xFF800000> : vector<8xf32>
    %184 = vector.multi_reduction <maximumf>, %183, %cst_44 [1] : vector<8x128xf32> to vector<8xf32>
    %185 = vector.shape_cast %184 : vector<8xf32> to vector<8x1xf32>
    %186 = vector.broadcast %185 : vector<8x1xf32> to vector<8x128xf32>
    %187 = arith.subf %183, %186 : vector<8x128xf32>
    %188 = math.exp %187 : vector<8x128xf32>
    %cst_45 = arith.constant dense<0.000000e+00> : vector<8xf32>
    %189 = vector.multi_reduction <add>, %188, %cst_45 [1] : vector<8x128xf32> to vector<8xf32>
    %190 = vector.shape_cast %189 : vector<8xf32> to vector<8x1xf32>
    %191 = math.log %190 : vector<8x1xf32>
    %192 = vector.broadcast %191 : vector<8x1xf32> to vector<8x128xf32>
    %193 = arith.subf %187, %192 : vector<8x128xf32>
    %c0_46 = arith.constant 0 : index
    %c0_47 = arith.constant 0 : index
    %194 = vector.load %arg5[%c0_46, %c0_47] : memref<8x128xf32, #tpu.memory_space<vmem>>, vector<8x128xf32>
    tpu.vector_store %arg5[%c0_46, %c0_47], %193 {strides = array<i32>} : memref<8x128xf32, #tpu.memory_space<vmem>>, vector<8x128xf32>,
    return
  }
}

</mosaic_0001>

<llo_original>
// kernel: _forward.1
$region0: #{_forward.1}
  #allocation0 [shape = 'u32[]', space=smem, size = 0x4, offset = 0x4, fixed_abs, tag = 'smem constant byte address 0x4 - core index']
  #allocation1 [shape = 'u32[144,128]{1,0:T(1,128)}', space=vmem, size = 0x12000, scoped, tag = 'internal scratch']
  %s0 = inlined_call_operand.vmem [shape: s32[64,1], index: 0, kind: input, shape index: {}]
  %s1 = inlined_call_operand.vmem [shape: f32[64,128], index: 1, kind: input, shape index: {}]
  %s2 = inlined_call_operand.hbm [shape: f32[32,128], index: 2, kind: input, shape index: {}]
  %s3 = inlined_call_operand.hbm [shape: f32[32,128], index: 3, kind: input, shape index: {}]
  %s4 = inlined_call_operand.vmem [shape: f32[1,128], index: 4, kind: input, shape index: {}]
  %s5 = inlined_call_operand.hbm [shape: f32[8,128], index: 5, kind: output, shape index: {}]
  %s6 = sld [smem:[#allocation0]]
  $region38: #{_forward.1} parent=0
    _
  %s8 = ssub.s32 1, %s6
  %s9 = scalar_select 0, %s8, %s6
  $region1: #{_forward.1} parent=0
    #allocation2 [shape = 'u8[16384]{0}', space=vmem, size = 0x4000, scoped, tag = 'input window, operand 2, single buffered']
    #allocation3 [shape = 's32[1]{0}', space=sflag, size = 0x4, scoped, tag = 'scoped memory for _forward.1']
    #allocation4 [shape = 's32[1]{0}', space=sflag, size = 0x4, scoped, tag = 'scoped memory for _forward.1']
    #allocation5 [shape = 'u8[16384]{0}', space=vmem, size = 0x4000, scoped, tag = 'input window, operand 3, single buffered']
    #allocation6 [shape = 's32[1]{0}', space=sflag, size = 0x4, scoped, tag = 'scoped memory for _forward.1']
    #allocation7 [shape = 'u8[4096]{0}', space=vmem, size = 0x1000, scoped, tag = 'output window, operand 0, single buffered']
    %10 = vsyncpa [#allocation3], 0
    %11 = vsyncpa [#allocation6], 0
    %12 = vsyncpa [#allocation4], 0
    // Predicated region
    $region2: #{_forward.1} parent=1 // pred_check
      _
    $region3: #{_forward.1} parent=1 // pred_check_branch
      %14 = sbr.rel (0) target = $region5
    $region4: #{_forward.1} parent=1 // pred_region
      _
    $region5: #{_forward.1} parent=1 // pred_fallthru
      _
    // Predicated region
    $region6: #{_forward.1} parent=1 // pred_check
      _
    $region7: #{_forward.1} parent=1 // pred_check_branch
      %16 = sbr.rel (0) target = $region9
    $region8: #{_forward.1} parent=1 // pred_region
      _
    $region9: #{_forward.1} parent=1 // pred_fallthru
      _
    // Predicated region
    $region10: #{_forward.1} parent=1 // pred_check
      _
    $region11: #{_forward.1} parent=1 // pred_check_branch
      %18 = sbr.rel (0) target = $region13
    $region12: #{_forward.1} parent=1 // pred_region
      %s20 = ssub.s32 512, 512
      %21 = vsyncadd [#allocation3], %s20
      %s22 = sshll.u32 [#allocation2], 4
      %s23 = int_to_ptr.vmem [resolvable:$true] %s22
      %28 = dma.hbm_to_vmem [thread:$0]  %s2, 512, %s23, [#allocation3], 128, 128, 8
    $region13: #{_forward.1} parent=1 // pred_fallthru
      _
    // Predicated region
    $region14: #{_forward.1} parent=1 // pred_check
      _
    $region15: #{_forward.1} parent=1 // pred_check_branch
      %30 = sbr.rel (0) target = $region17
    $region16: #{_forward.1} parent=1 // pred_region
      %s32 = ssub.s32 512, 512
      %33 = vsyncadd [#allocation6], %s32
      %s34 = sshll.u32 [#allocation5], 4
      %s35 = int_to_ptr.vmem [resolvable:$true] %s34
      %40 = dma.hbm_to_vmem [thread:$0]  %s3, 512, %s35, [#allocation6], 128, 128, 8
    $region17: #{_forward.1} parent=1 // pred_fallthru
      _
    // Predicated region
    $region18: #{_forward.1} parent=1 // pred_check
      _
    $region19: #{_forward.1} parent=1 // pred_check_branch
      %42 = sbr.rel (0) target = $region21
    $region20: #{_forward.1} parent=1 // pred_region
      _
    $region21: #{_forward.1} parent=1 // pred_fallthru
      _
    // Predicated region
    $region22: #{_forward.1} parent=1 // pred_check
      _
    $region23: #{_forward.1} parent=1 // pred_check_branch
      %44 = sbr.rel (0) target = $region25
    $region24: #{_forward.1} parent=1 // pred_region
      %45 = dma.done [#allocation3], 512
    $region25: #{_forward.1} parent=1 // pred_fallthru
      _
    // Predicated region
    $region26: #{_forward.1} parent=1 // pred_check
      _
    $region27: #{_forward.1} parent=1 // pred_check_branch
      %47 = sbr.rel (0) target = $region29
    $region28: #{_forward.1} parent=1 // pred_region
      %48 = dma.done [#allocation6], 512
    $region29: #{_forward.1} parent=1 // pred_fallthru
      _
    %v49 = vld [vmem:[%s0] sm:$0xff]
    %v50 = vld [vmem:[%s0 + $0x8] sm:$0xff]
    %v51 = vld [vmem:[%s0 + $0x10] sm:$0xff]
    %v52 = vld [vmem:[%s0 + $0x18] sm:$0xff]
    %v53 = vld [vmem:[%s0 + $0x20] sm:$0xff]
    %v54 = vld [vmem:[%s0 + $0x28] sm:$0xff]
    %v55 = vld [vmem:[%s0 + $0x30] sm:$0xff]
    %v56 = vld [vmem:[%s0 + $0x38] sm:$0xff]
    %v57 = vlaneseq
    %v58 = vand.u32 %v57, 127
    %59 = vset.pattern.permute.xlu0 0
    %60 = vperm.xlu0 %59, %v49
    %v61 = vpop.permute.xlu0 %60
    %62 = vset.pattern.permute.xlu0 0
    %63 = vperm.xlu0 %62, %v50
    %v64 = vpop.permute.xlu0 %63
    %65 = vset.pattern.permute.xlu0 0
    %66 = vperm.xlu0 %65, %v51
    %v67 = vpop.permute.xlu0 %66
    %68 = vset.pattern.permute.xlu0 0
    %69 = vperm.xlu0 %68, %v52
    %v70 = vpop.permute.xlu0 %69
    %71 = vset.pattern.permute.xlu0 0
    %72 = vperm.xlu0 %71, %v53
    %v73 = vpop.permute.xlu0 %72
    %74 = vset.pattern.permute.xlu0 0
    %75 = vperm.xlu0 %74, %v54
    %v76 = vpop.permute.xlu0 %75
    %77 = vset.pattern.permute.xlu0 0
    %78 = vperm.xlu0 %77, %v55
    %v79 = vpop.permute.xlu0 %78
    %80 = vset.pattern.permute.xlu0 0
    %81 = vperm.xlu0 %80, %v56
    %v82 = vpop.permute.xlu0 %81
    %vm83 = vcmp.eq.s32.totalorder %v58, %v61
    %vm84 = vcmp.eq.s32.totalorder %v58, %v64
    %vm85 = vcmp.eq.s32.totalorder %v58, %v67
    %vm86 = vcmp.eq.s32.totalorder %v58, %v70
    %vm87 = vcmp.eq.s32.totalorder %v58, %v73
    %vm88 = vcmp.eq.s32.totalorder %v58, %v76
    %vm89 = vcmp.eq.s32.totalorder %v58, %v79
    %vm90 = vcmp.eq.s32.totalorder %v58, %v82
    %v91 = vsel %vm83, 1, 0
    %v92 = vsel %vm84, 1, 0
    %v93 = vsel %vm85, 1, 0
    %v94 = vsel %vm86, 1, 0
    %v95 = vsel %vm87, 1, 0
    %v96 = vsel %vm88, 1, 0
    %v97 = vsel %vm89, 1, 0
    %v98 = vsel %vm90, 1, 0
    %v99 = vcvt.s32.f32 %v91
    %v100 = vcvt.s32.f32 %v92
    %v101 = vcvt.s32.f32 %v93
    %v102 = vcvt.s32.f32 %v94
    %v103 = vcvt.s32.f32 %v95
    %v104 = vcvt.s32.f32 %v96
    %v105 = vcvt.s32.f32 %v97
    %v106 = vcvt.s32.f32 %v98
    %v107 = vld [vmem:[%s1] sm:$0xff]
    %v108 = vld [vmem:[%s1 + $0x8] sm:$0xff]
    %v109 = vld [vmem:[%s1 + $0x10] sm:$0xff]
    %v110 = vld [vmem:[%s1 + $0x18] sm:$0xff]
    %v111 = vld [vmem:[%s1 + $0x20] sm:$0xff]
    %v112 = vld [vmem:[%s1 + $0x28] sm:$0xff]
    %v113 = vld [vmem:[%s1 + $0x30] sm:$0xff]
    %v114 = vld [vmem:[%s1 + $0x38] sm:$0xff]
    %vm115 = vcmask 523264
    %v117 = vsel %vm115, %v99, 0
    %v120 = vsel %vm115, %v100, 0
    %v123 = vsel %vm115, %v101, 0
    %v126 = vsel %vm115, %v102, 0
    %v129 = vsel %vm115, %v103, 0
    %v132 = vsel %vm115, %v104, 0
    %v135 = vsel %vm115, %v105, 0
    %v138 = vsel %vm115, %v106, 0
    %140 = vmatprep.subr.mxu0 0.0
    %141 = vmatpush1.msra.mxu0 %v107
    %142 = vmatprep.subr.mxu0 0.0
    %143 = vmatpush1.msra.mxu0 %v108
    %144 = vmatprep.subr.mxu0 0.0
    %145 = vmatpush1.msra.mxu0 %v109
    %146 = vmatprep.subr.mxu0 0.0
    %147 = vmatpush1.msra.mxu0 %v110
    %148 = vmatprep.subr.mxu0 0.0
    %149 = vmatpush1.msra.mxu0 %v111
    %150 = vmatprep.subr.mxu0 0.0
    %151 = vmatpush1.msra.mxu0 %v112
    %152 = vmatprep.subr.mxu0 0.0
    %153 = vmatpush1.msra.mxu0 %v113
    %154 = vmatprep.subr.mxu0 0.0
    %155 = vmatpush1.msra.mxu0 %v114
    %156 = vmatprep.subr.mxu0 0.0
    %157 = vmatpush1.msra.mxu0 0.0
    %158 = vmatprep.subr.mxu0 0.0
    %159 = vmatpush1.msra.mxu0 0.0
    %160 = vmatprep.subr.mxu0 0.0
    %161 = vmatpush1.msra.mxu0 0.0
    %162 = vmatprep.subr.mxu0 0.0
    %163 = vmatpush1.msra.mxu0 0.0
    %164 = vmatprep.subr.mxu0 0.0
    %165 = vmatpush1.msra.mxu0 0.0
    %166 = vmatprep.subr.mxu0 0.0
    %167 = vmatpush1.msra.mxu0 0.0
    %168 = vmatprep.subr.mxu0 0.0
    %169 = vmatpush1.msra.mxu0 0.0
    %170 = vmatprep.subr.mxu0 0.0
    %171 = vmatpush1.msra.mxu0 0.0
    %172 = vmatprep.subr.mxu0 0.0
    %173 = vmatpush1.msra.mxu0 0.0
    %174 = vmatprep.subr.mxu0 0.0
    %175 = vmatpush1.msra.mxu0 0.0
    %176 = vmatprep.subr.mxu0 0.0
    %177 = vmatpush1.msra.mxu0 0.0
    %178 = vmatprep.subr.mxu0 0.0
    %179 = vmatpush1.msra.mxu0 0.0
    %180 = vmatprep.subr.mxu0 0.0
    %181 = vmatpush1.msra.mxu0 0.0
    %182 = vmatprep.subr.mxu0 0.0
    %183 = vmatpush1.msra.mxu0 0.0
    %184 = vmatprep.subr.mxu0 0.0
    %185 = vmatpush1.msra.mxu0 0.0
    %186 = vmatprep.subr.mxu0 0.0
    %187 = vmatpush1.msra.mxu0 0.0
    %188 = vmatprep.subr.mxu0 0.0
    %189 = vmatpush1.msra.mxu0 0.0
    %190 = vmatprep.subr.mxu0 0.0
    %191 = vmatpush1.msra.mxu0 0.0
    %192 = vmatprep.subr.mxu0 0.0
    %193 = vmatpush1.msra.mxu0 0.0
    %194 = vmatprep.subr.mxu0 0.0
    %195 = vmatpush1.msra.mxu0 0.0
    %196 = vmatprep.subr.mxu0 0.0
    %197 = vmatpush1.msra.mxu0 0.0
    %198 = vmatprep.subr.mxu0 0.0
    %199 = vmatpush1.msra.mxu0 0.0
    %200 = vmatprep.subr.mxu0 0.0
    %201 = vmatpush1.msra.mxu0 0.0
    %202 = vmatprep.subr.mxu0 0.0
    %203 = vmatpush1.msra.mxu0 0.0
    %204 = vmatprep.mubr.f32.mxu0 0.0
    %205 = vmatmul.mubr.f32.gmra.mrb[0].mxu0 %v117
    %v206 = vpop.f32.mrb[0].mxu0
    %v207 = vadd.f32 0.0, %v206
    %v208 = vpop.f32.mrb[0].mxu0
    %209 = vmatprep.mubr.f32.mxu0 0.0
    %210 = vmatmul.mubr.f32.gmra.mrb[0].mxu0 %v120
    %v211 = vpop.f32.mrb[0].mxu0
    %v212 = vadd.f32 0.0, %v211
    %v213 = vpop.f32.mrb[0].mxu0
    %214 = vmatprep.mubr.f32.mxu0 0.0
    %215 = vmatmul.mubr.f32.gmra.mrb[0].mxu0 %v123
    %v216 = vpop.f32.mrb[0].mxu0
    %v217 = vadd.f32 0.0, %v216
    %v218 = vpop.f32.mrb[0].mxu0
    %219 = vmatprep.mubr.f32.mxu0 0.0
    %220 = vmatmul.mubr.f32.gmra.mrb[0].mxu0 %v126
    %v221 = vpop.f32.mrb[0].mxu0
    %v222 = vadd.f32 0.0, %v221
    %v223 = vpop.f32.mrb[0].mxu0
    %224 = vmatprep.mubr.f32.mxu0 0.0
    %225 = vmatmul.mubr.f32.gmra.mrb[0].mxu0 %v129
    %v226 = vpop.f32.mrb[0].mxu0
    %v227 = vadd.f32 0.0, %v226
    %v228 = vpop.f32.mrb[0].mxu0
    %229 = vmatprep.mubr.f32.mxu0 0.0
    %230 = vmatmul.mubr.f32.gmra.mrb[0].mxu0 %v132
    %v231 = vpop.f32.mrb[0].mxu0
    %v232 = vadd.f32 0.0, %v231
    %v233 = vpop.f32.mrb[0].mxu0
    %234 = vmatprep.mubr.f32.mxu0 0.0
    %235 = vmatmul.mubr.f32.gmra.mrb[0].mxu0 %v135
    %v236 = vpop.f32.mrb[0].mxu0
    %v237 = vadd.f32 0.0, %v236
    %v238 = vpop.f32.mrb[0].mxu0
    %239 = vmatprep.mubr.f32.mxu0 0.0
    %240 = vmatmul.mubr.f32.gmra.mrb[0].mxu0 %v138
    %v241 = vpop.f32.mrb[0].mxu0
    %v242 = vadd.f32 0.0, %v241
    %v243 = vpop.f32.mrb[0].mxu0
    %244 = vdwg.mxu0
    %v245 = vld [vmem:[#allocation2] sm:$0xff]
    %v246 = vld [vmem:[#allocation2 + $0x8] sm:$0xff]
    %v247 = vld [vmem:[#allocation2 + $0x10] sm:$0xff]
    %v248 = vld [vmem:[#allocation2 + $0x18] sm:$0xff]
    %vm249 = vcmask 261120
    %v251 = vsel %vm249, 0.0, 0
    %253 = vmatprep.subr.mxu0 0.0
    %254 = vmatpush1.msra.mxu0 %v245
    %255 = vmatprep.subr.mxu0 0.0
    %256 = vmatpush1.msra.mxu0 %v246
    %257 = vmatprep.subr.mxu0 0.0
    %258 = vmatpush1.msra.mxu0 %v247
    %259 = vmatprep.subr.mxu0 0.0
    %260 = vmatpush1.msra.mxu0 %v248
    %261 = vmatprep.subr.mxu0 0.0
    %262 = vmatpush1.msra.mxu0 0.0
    %263 = vmatprep.subr.mxu0 0.0
    %264 = vmatpush1.msra.mxu0 0.0
    %265 = vmatprep.subr.mxu0 0.0
    %266 = vmatpush1.msra.mxu0 0.0
    %267 = vmatprep.subr.mxu0 0.0
    %268 = vmatpush1.msra.mxu0 0.0
    %269 = vmatprep.subr.mxu0 0.0
    %270 = vmatpush1.msra.mxu0 0.0
    %271 = vmatprep.subr.mxu0 0.0
    %272 = vmatpush1.msra.mxu0 0.0
    %273 = vmatprep.subr.mxu0 0.0
    %274 = vmatpush1.msra.mxu0 0.0
    %275 = vmatprep.subr.mxu0 0.0
    %276 = vmatpush1.msra.mxu0 0.0
    %277 = vmatprep.subr.mxu0 0.0
    %278 = vmatpush1.msra.mxu0 0.0
    %279 = vmatprep.subr.mxu0 0.0
    %280 = vmatpush1.msra.mxu0 0.0
    %281 = vmatprep.subr.mxu0 0.0
    %282 = vmatpush1.msra.mxu0 0.0
    %283 = vmatprep.subr.mxu0 0.0
    %284 = vmatpush1.msra.mxu0 0.0
    %285 = vmatprep.subr.mxu0 0.0
    %286 = vmatpush1.msra.mxu0 0.0
    %287 = vmatprep.subr.mxu0 0.0
    %288 = vmatpush1.msra.mxu0 0.0
    %289 = vmatprep.subr.mxu0 0.0
    %290 = vmatpush1.msra.mxu0 0.0
    %291 = vmatprep.subr.mxu0 0.0
    %292 = vmatpush1.msra.mxu0 0.0
    %293 = vmatprep.subr.mxu0 0.0
    %294 = vmatpush1.msra.mxu0 0.0
    %295 = vmatprep.subr.mxu0 0.0
    %296 = vmatpush1.msra.mxu0 0.0
    %297 = vmatprep.subr.mxu0 0.0
    %298 = vmatpush1.msra.mxu0 0.0
    %299 = vmatprep.subr.mxu0 0.0
    %300 = vmatpush1.msra.mxu0 0.0
    %301 = vmatprep.subr.mxu0 0.0
    %302 = vmatpush1.msra.mxu0 0.0
    %303 = vmatprep.subr.mxu0 0.0
    %304 = vmatpush1.msra.mxu0 0.0
    %305 = vmatprep.subr.mxu0 0.0
    %306 = vmatpush1.msra.mxu0 0.0
    %307 = vmatprep.subr.mxu0 0.0
    %308 = vmatpush1.msra.mxu0 0.0
    %309 = vmatprep.subr.mxu0 0.0
    %310 = vmatpush1.msra.mxu0 0.0
    %311 = vmatprep.subr.mxu0 0.0
    %312 = vmatpush1.msra.mxu0 0.0
    %313 = vmatprep.subr.mxu0 0.0
    %314 = vmatpush1.msra.mxu0 0.0
    %315 = vmatprep.subr.mxu0 0.0
    %316 = vmatpush1.msra.mxu0 0.0
    %317 = vmatprep.mubr.f32.mxu0 0.0
    %318 = vmatmul.mubr.f32.gmra.mrb[0].mxu0 %v251
    %v319 = vpop.f32.mrb[0].mxu0
    %v320 = vadd.f32 0.0, %v319
    %v321 = vpop.f32.mrb[0].mxu0
    %322 = vdwg.mxu0
    %v323 = vadd.f32 %v207, %v320
    %v324 = vxor.u32 %v323, 2147483648
    %v325 = vmul.f32 %v324, 1.442695
    %v326 = vpow.pop %v325
    %v327 = vadd.f32 %v326, 1.0
    %v328 = vrcp.pop %v327
    %v329 = vmul.f32 1.0, %v328
    %v330 = vmul.f32 %v329, 2.0
    %v331 = vsub.f32 %v330, 1.0
    %v332 = vmul.f32 %v329, 0.0
    %334 = vrot.lane.b32.xlu0 %v331, 64
    %v335 = vpop.permute.xlu0 %334
    %v337 = vmul.f32 %v329, %v335
    %339 = vrot.lane.b32.xlu0 %v337, 32
    %v340 = vpop.permute.xlu0 %339
    %v342 = vadd.f32 %v332, %v340
    %v343 = vtanh.pop %v342
    %345 = vrot.lane.b32.xlu0 %v343, 64
    %v346 = vpop.permute.xlu0 %345
    %v348 = vmul.f32 %v329, %v346
    %350 = vrot.lane.b32.xlu0 %v348, 32
    %v351 = vpop.permute.xlu0 %350
    %v352 = vsel %vm249, %v351, 0
    %354 = vmatprep.subr.mxu0 0.0
    %355 = vmatpush1.msra.mxu0 %v245
    %356 = vmatprep.subr.mxu0 0.0
    %357 = vmatpush1.msra.mxu0 %v246
    %358 = vmatprep.subr.mxu0 0.0
    %359 = vmatpush1.msra.mxu0 %v247
    %360 = vmatprep.subr.mxu0 0.0
    %361 = vmatpush1.msra.mxu0 %v248
    %362 = vmatprep.subr.mxu0 0.0
    %363 = vmatpush1.msra.mxu0 0.0
    %364 = vmatprep.subr.mxu0 0.0
    %365 = vmatpush1.msra.mxu0 0.0
    %366 = vmatprep.subr.mxu0 0.0
    %367 = vmatpush1.msra.mxu0 0.0
    %368 = vmatprep.subr.mxu0 0.0
    %369 = vmatpush1.msra.mxu0 0.0
    %370 = vmatprep.subr.mxu0 0.0
    %371 = vmatpush1.msra.mxu0 0.0
    %372 = vmatprep.subr.mxu0 0.0
    %373 = vmatpush1.msra.mxu0 0.0
    %374 = vmatprep.subr.mxu0 0.0
    %375 = vmatpush1.msra.mxu0 0.0
    %376 = vmatprep.subr.mxu0 0.0
    %377 = vmatpush1.msra.mxu0 0.0
    %378 = vmatprep.subr.mxu0 0.0
    %379 = vmatpush1.msra.mxu0 0.0
    %380 = vmatprep.subr.mxu0 0.0
    %381 = vmatpush1.msra.mxu0 0.0
    %382 = vmatprep.subr.mxu0 0.0
    %383 = vmatpush1.msra.mxu0 0.0
    %384 = vmatprep.subr.mxu0 0.0
    %385 = vmatpush1.msra.mxu0 0.0
    %386 = vmatprep.subr.mxu0 0.0
    %387 = vmatpush1.msra.mxu0 0.0
    %388 = vmatprep.subr.mxu0 0.0
    %389 = vmatpush1.msra.mxu0 0.0
    %390 = vmatprep.subr.mxu0 0.0
    %391 = vmatpush1.msra.mxu0 0.0
    %392 = vmatprep.subr.mxu0 0.0
    %393 = vmatpush1.msra.mxu0 0.0
    %394 = vmatprep.subr.mxu0 0.0
    %395 = vmatpush1.msra.mxu0 0.0
    %396 = vmatprep.subr.mxu0 0.0
    %397 = vmatpush1.msra.mxu0 0.0
    %398 = vmatprep.subr.mxu0 0.0
    %399 = vmatpush1.msra.mxu0 0.0
    %400 = vmatprep.subr.mxu0 0.0
    %401 = vmatpush1.msra.mxu0 0.0
    %402 = vmatprep.subr.mxu0 0.0
    %403 = vmatpush1.msra.mxu0 0.0
    %404 = vmatprep.subr.mxu0 0.0
    %405 = vmatpush1.msra.mxu0 0.0
    %406 = vmatprep.subr.mxu0 0.0
    %407 = vmatpush1.msra.mxu0 0.0
    %408 = vmatprep.subr.mxu0 0.0
    %409 = vmatpush1.msra.mxu0 0.0
    %410 = vmatprep.subr.mxu0 0.0
    %411 = vmatpush1.msra.mxu0 0.0
    %412 = vmatprep.subr.mxu0 0.0
    %413 = vmatpush1.msra.mxu0 0.0
    %414 = vmatprep.subr.mxu0 0.0
    %415 = vmatpush1.msra.mxu0 0.0
    %416 = vmatprep.subr.mxu0 0.0
    %417 = vmatpush1.msra.mxu0 0.0
    %418 = vmatprep.mubr.f32.mxu0 0.0
    %419 = vmatmul.mubr.f32.gmra.mrb[0].mxu0 %v352
    %v420 = vpop.f32.mrb[0].mxu0
    %v421 = vadd.f32 0.0, %v420
    %v422 = vpop.f32.mrb[0].mxu0
    %423 = vdwg.mxu0
    %v424 = vadd.f32 %v212, %v421
    %v425 = vxor.u32 %v424, 2147483648
    %v426 = vmul.f32 %v425, 1.442695
    %v427 = vpow.pop %v426
    %v428 = vadd.f32 %v427, 1.0
    %v429 = vrcp.pop %v428
    %v430 = vmul.f32 1.0, %v429
    %v431 = vmul.f32 %v430, 2.0
    %v432 = vsub.f32 %v431, 1.0
    %v433 = vmul.f32 %v430, %v342
    %435 = vrot.lane.b32.xlu0 %v432, 64
    %v436 = vpop.permute.xlu0 %435
    %v438 = vmul.f32 %v430, %v436
    %440 = vrot.lane.b32.xlu0 %v438, 32
    %v441 = vpop.permute.xlu0 %440
    %v443 = vadd.f32 %v433, %v441
    %v444 = vtanh.pop %v443
    %446 = vrot.lane.b32.xlu0 %v444, 64
    %v447 = vpop.permute.xlu0 %446
    %v449 = vmul.f32 %v430, %v447
    %451 = vrot.lane.b32.xlu0 %v449, 32
    %v452 = vpop.permute.xlu0 %451
    %v453 = vsel %vm249, %v452, 0
    %455 = vmatprep.subr.mxu0 0.0
    %456 = vmatpush1.msra.mxu0 %v245
    %457 = vmatprep.subr.mxu0 0.0
    %458 = vmatpush1.msra.mxu0 %v246
    %459 = vmatprep.subr.mxu0 0.0
    %460 = vmatpush1.msra.mxu0 %v247
    %461 = vmatprep.subr.mxu0 0.0
    %462 = vmatpush1.msra.mxu0 %v248
    %463 = vmatprep.subr.mxu0 0.0
    %464 = vmatpush1.msra.mxu0 0.0
    %465 = vmatprep.subr.mxu0 0.0
    %466 = vmatpush1.msra.mxu0 0.0
    %467 = vmatprep.subr.mxu0 0.0
    %468 = vmatpush1.msra.mxu0 0.0
    %469 = vmatprep.subr.mxu0 0.0
    %470 = vmatpush1.msra.mxu0 0.0
    %471 = vmatprep.subr.mxu0 0.0
    %472 = vmatpush1.msra.mxu0 0.0
    %473 = vmatprep.subr.mxu0 0.0
    %474 = vmatpush1.msra.mxu0 0.0
    %475 = vmatprep.subr.mxu0 0.0
    %476 = vmatpush1.msra.mxu0 0.0
    %477 = vmatprep.subr.mxu0 0.0
    %478 = vmatpush1.msra.mxu0 0.0
    %479 = vmatprep.subr.mxu0 0.0
    %480 = vmatpush1.msra.mxu0 0.0
    %481 = vmatprep.subr.mxu0 0.0
    %482 = vmatpush1.msra.mxu0 0.0
    %483 = vmatprep.subr.mxu0 0.0
    %484 = vmatpush1.msra.mxu0 0.0
    %485 = vmatprep.subr.mxu0 0.0
    %486 = vmatpush1.msra.mxu0 0.0
    %487 = vmatprep.subr.mxu0 0.0
    %488 = vmatpush1.msra.mxu0 0.0
    %489 = vmatprep.subr.mxu0 0.0
    %490 = vmatpush1.msra.mxu0 0.0
    %491 = vmatprep.subr.mxu0 0.0
    %492 = vmatpush1.msra.mxu0 0.0
    %493 = vmatprep.subr.mxu0 0.0
    %494 = vmatpush1.msra.mxu0 0.0
    %495 = vmatprep.subr.mxu0 0.0
    %496 = vmatpush1.msra.mxu0 0.0
    %497 = vmatprep.subr.mxu0 0.0
    %498 = vmatpush1.msra.mxu0 0.0
    %499 = vmatprep.subr.mxu0 0.0
    %500 = vmatpush1.msra.mxu0 0.0
    %501 = vmatprep.subr.mxu0 0.0
    %502 = vmatpush1.msra.mxu0 0.0
    %503 = vmatprep.subr.mxu0 0.0
    %504 = vmatpush1.msra.mxu0 0.0
    %505 = vmatprep.subr.mxu0 0.0
    %506 = vmatpush1.msra.mxu0 0.0
    %507 = vmatprep.subr.mxu0 0.0
    %508 = vmatpush1.msra.mxu0 0.0
    %509 = vmatprep.subr.mxu0 0.0
    %510 = vmatpush1.msra.mxu0 0.0
    %511 = vmatprep.subr.mxu0 0.0
    %512 = vmatpush1.msra.mxu0 0.0
    %513 = vmatprep.subr.mxu0 0.0
    %514 = vmatpush1.msra.mxu0 0.0
    %515 = vmatprep.subr.mxu0 0.0
    %516 = vmatpush1.msra.mxu0 0.0
    %517 = vmatprep.subr.mxu0 0.0
    %518 = vmatpush1.msra.mxu0 0.0
    %519 = vmatprep.mubr.f32.mxu0 0.0
    %520 = vmatmul.mubr.f32.gmra.mrb[0].mxu0 %v453
    %v521 = vpop.f32.mrb[0].mxu0
    %v522 = vadd.f32 0.0, %v521
    %v523 = vpop.f32.mrb[0].mxu0
    %524 = vdwg.mxu0
    %v525 = vadd.f32 %v217, %v522
    %v526 = vxor.u32 %v525, 2147483648
    %v527 = vmul.f32 %v526, 1.442695
    %v528 = vpow.pop %v527
    %v529 = vadd.f32 %v528, 1.0
    %v530 = vrcp.pop %v529
    %v531 = vmul.f32 1.0, %v530
    %v532 = vmul.f32 %v531, 2.0
    %v533 = vsub.f32 %v532, 1.0
    %v534 = vmul.f32 %v531, %v443
    %536 = vrot.lane.b32.xlu0 %v533, 64
    %v537 = vpop.permute.xlu0 %536
    %v539 = vmul.f32 %v531, %v537
    %541 = vrot.lane.b32.xlu0 %v539, 32
    %v542 = vpop.permute.xlu0 %541
    %v544 = vadd.f32 %v534, %v542
    %v545 = vtanh.pop %v544
    %547 = vrot.lane.b32.xlu0 %v545, 64
    %v548 = vpop.permute.xlu0 %547
    %v550 = vmul.f32 %v531, %v548
    %552 = vrot.lane.b32.xlu0 %v550, 32
    %v553 = vpop.permute.xlu0 %552
    %v554 = vsel %vm249, %v553, 0
    %556 = vmatprep.subr.mxu0 0.0
    %557 = vmatpush1.msra.mxu0 %v245
    %558 = vmatprep.subr.mxu0 0.0
    %559 = vmatpush1.msra.mxu0 %v246
    %560 = vmatprep.subr.mxu0 0.0
    %561 = vmatpush1.msra.mxu0 %v247
    %562 = vmatprep.subr.mxu0 0.0
    %563 = vmatpush1.msra.mxu0 %v248
    %564 = vmatprep.subr.mxu0 0.0
    %565 = vmatpush1.msra.mxu0 0.0
    %566 = vmatprep.subr.mxu0 0.0
    %567 = vmatpush1.msra.mxu0 0.0
    %568 = vmatprep.subr.mxu0 0.0
    %569 = vmatpush1.msra.mxu0 0.0
    %570 = vmatprep.subr.mxu0 0.0
    %571 = vmatpush1.msra.mxu0 0.0
    %572 = vmatprep.subr.mxu0 0.0
    %573 = vmatpush1.msra.mxu0 0.0
    %574 = vmatprep.subr.mxu0 0.0
    %575 = vmatpush1.msra.mxu0 0.0
    %576 = vmatprep.subr.mxu0 0.0
    %577 = vmatpush1.msra.mxu0 0.0
    %578 = vmatprep.subr.mxu0 0.0
    %579 = vmatpush1.msra.mxu0 0.0
    %580 = vmatprep.subr.mxu0 0.0
    %581 = vmatpush1.msra.mxu0 0.0
    %582 = vmatprep.subr.mxu0 0.0
    %583 = vmatpush1.msra.mxu0 0.0
    %584 = vmatprep.subr.mxu0 0.0
    %585 = vmatpush1.msra.mxu0 0.0
    %586 = vmatprep.subr.mxu0 0.0
    %587 = vmatpush1.msra.mxu0 0.0
    %588 = vmatprep.subr.mxu0 0.0
    %589 = vmatpush1.msra.mxu0 0.0
    %590 = vmatprep.subr.mxu0 0.0
    %591 = vmatpush1.msra.mxu0 0.0
    %592 = vmatprep.subr.mxu0 0.0
    %593 = vmatpush1.msra.mxu0 0.0
    %594 = vmatprep.subr.mxu0 0.0
    %595 = vmatpush1.msra.mxu0 0.0
    %596 = vmatprep.subr.mxu0 0.0
    %597 = vmatpush1.msra.mxu0 0.0
    %598 = vmatprep.subr.mxu0 0.0
    %599 = vmatpush1.msra.mxu0 0.0
    %600 = vmatprep.subr.mxu0 0.0
    %601 = vmatpush1.msra.mxu0 0.0
    %602 = vmatprep.subr.mxu0 0.0
    %603 = vmatpush1.msra.mxu0 0.0
    %604 = vmatprep.subr.mxu0 0.0
    %605 = vmatpush1.msra.mxu0 0.0
    %606 = vmatprep.subr.mxu0 0.0
    %607 = vmatpush1.msra.mxu0 0.0
    %608 = vmatprep.subr.mxu0 0.0
    %609 = vmatpush1.msra.mxu0 0.0
    %610 = vmatprep.subr.mxu0 0.0
    %611 = vmatpush1.msra.mxu0 0.0
    %612 = vmatprep.subr.mxu0 0.0
    %613 = vmatpush1.msra.mxu0 0.0
    %614 = vmatprep.subr.mxu0 0.0
    %615 = vmatpush1.msra.mxu0 0.0
    %616 = vmatprep.subr.mxu0 0.0
    %617 = vmatpush1.msra.mxu0 0.0
    %618 = vmatprep.subr.mxu0 0.0
    %619 = vmatpush1.msra.mxu0 0.0
    %620 = vmatprep.mubr.f32.mxu0 0.0
    %621 = vmatmul.mubr.f32.gmra.mrb[0].mxu0 %v554
    %v622 = vpop.f32.mrb[0].mxu0
    %v623 = vadd.f32 0.0, %v622
    %v624 = vpop.f32.mrb[0].mxu0
    %625 = vdwg.mxu0
    %v626 = vadd.f32 %v222, %v623
    %v627 = vxor.u32 %v626, 2147483648
    %v628 = vmul.f32 %v627, 1.442695
    %v629 = vpow.pop %v628
    %v630 = vadd.f32 %v629, 1.0
    %v631 = vrcp.pop %v630
    %v632 = vmul.f32 1.0, %v631
    %v633 = vmul.f32 %v632, 2.0
    %v634 = vsub.f32 %v633, 1.0
    %v635 = vmul.f32 %v632, %v544
    %637 = vrot.lane.b32.xlu0 %v634, 64
    %v638 = vpop.permute.xlu0 %637
    %v640 = vmul.f32 %v632, %v638
    %642 = vrot.lane.b32.xlu0 %v640, 32
    %v643 = vpop.permute.xlu0 %642
    %v645 = vadd.f32 %v635, %v643
    %v646 = vtanh.pop %v645
    %648 = vrot.lane.b32.xlu0 %v646, 64
    %v649 = vpop.permute.xlu0 %648
    %v651 = vmul.f32 %v632, %v649
    %653 = vrot.lane.b32.xlu0 %v651, 32
    %v654 = vpop.permute.xlu0 %653
    %v655 = vsel %vm249, %v654, 0
    %657 = vmatprep.subr.mxu0 0.0
    %658 = vmatpush1.msra.mxu0 %v245
    %659 = vmatprep.subr.mxu0 0.0
    %660 = vmatpush1.msra.mxu0 %v246
    %661 = vmatprep.subr.mxu0 0.0
    %662 = vmatpush1.msra.mxu0 %v247
    %663 = vmatprep.subr.mxu0 0.0
    %664 = vmatpush1.msra.mxu0 %v248
    %665 = vmatprep.subr.mxu0 0.0
    %666 = vmatpush1.msra.mxu0 0.0
    %667 = vmatprep.subr.mxu0 0.0
    %668 = vmatpush1.msra.mxu0 0.0
    %669 = vmatprep.subr.mxu0 0.0
    %670 = vmatpush1.msra.mxu0 0.0
    %671 = vmatprep.subr.mxu0 0.0
    %672 = vmatpush1.msra.mxu0 0.0
    %673 = vmatprep.subr.mxu0 0.0
    %674 = vmatpush1.msra.mxu0 0.0
    %675 = vmatprep.subr.mxu0 0.0
    %676 = vmatpush1.msra.mxu0 0.0
    %677 = vmatprep.subr.mxu0 0.0
    %678 = vmatpush1.msra.mxu0 0.0
    %679 = vmatprep.subr.mxu0 0.0
    %680 = vmatpush1.msra.mxu0 0.0
    %681 = vmatprep.subr.mxu0 0.0
    %682 = vmatpush1.msra.mxu0 0.0
    %683 = vmatprep.subr.mxu0 0.0
    %684 = vmatpush1.msra.mxu0 0.0
    %685 = vmatprep.subr.mxu0 0.0
    %686 = vmatpush1.msra.mxu0 0.0
    %687 = vmatprep.subr.mxu0 0.0
    %688 = vmatpush1.msra.mxu0 0.0
    %689 = vmatprep.subr.mxu0 0.0
    %690 = vmatpush1.msra.mxu0 0.0
    %691 = vmatprep.subr.mxu0 0.0
    %692 = vmatpush1.msra.mxu0 0.0
    %693 = vmatprep.subr.mxu0 0.0
    %694 = vmatpush1.msra.mxu0 0.0
    %695 = vmatprep.subr.mxu0 0.0
    %696 = vmatpush1.msra.mxu0 0.0
    %697 = vmatprep.subr.mxu0 0.0
    %698 = vmatpush1.msra.mxu0 0.0
    %699 = vmatprep.subr.mxu0 0.0
    %700 = vmatpush1.msra.mxu0 0.0
    %701 = vmatprep.subr.mxu0 0.0
    %702 = vmatpush1.msra.mxu0 0.0
    %703 = vmatprep.subr.mxu0 0.0
    %704 = vmatpush1.msra.mxu0 0.0
    %705 = vmatprep.subr.mxu0 0.0
    %706 = vmatpush1.msra.mxu0 0.0
    %707 = vmatprep.subr.mxu0 0.0
    %708 = vmatpush1.msra.mxu0 0.0
    %709 = vmatprep.subr.mxu0 0.0
    %710 = vmatpush1.msra.mxu0 0.0
    %711 = vmatprep.subr.mxu0 0.0
    %712 = vmatpush1.msra.mxu0 0.0
    %713 = vmatprep.subr.mxu0 0.0
    %714 = vmatpush1.msra.mxu0 0.0
    %715 = vmatprep.subr.mxu0 0.0
    %716 = vmatpush1.msra.mxu0 0.0
    %717 = vmatprep.subr.mxu0 0.0
    %718 = vmatpush1.msra.mxu0 0.0
    %719 = vmatprep.subr.mxu0 0.0
    %720 = vmatpush1.msra.mxu0 0.0
    %721 = vmatprep.mubr.f32.mxu0 0.0
    %722 = vmatmul.mubr.f32.gmra.mrb[0].mxu0 %v655
    %v723 = vpop.f32.mrb[0].mxu0
    %v724 = vadd.f32 0.0, %v723
    %v725 = vpop.f32.mrb[0].mxu0
    %726 = vdwg.mxu0
    %v727 = vadd.f32 %v227, %v724
    %v728 = vxor.u32 %v727, 2147483648
    %v729 = vmul.f32 %v728, 1.442695
    %v730 = vpow.pop %v729
    %v731 = vadd.f32 %v730, 1.0
    %v732 = vrcp.pop %v731
    %v733 = vmul.f32 1.0, %v732
    %v734 = vmul.f32 %v733, 2.0
    %v735 = vsub.f32 %v734, 1.0
    %v736 = vmul.f32 %v733, %v645
    %738 = vrot.lane.b32.xlu0 %v735, 64
    %v739 = vpop.permute.xlu0 %738
    %v741 = vmul.f32 %v733, %v739
    %743 = vrot.lane.b32.xlu0 %v741, 32
    %v744 = vpop.permute.xlu0 %743
    %v746 = vadd.f32 %v736, %v744
    %v747 = vtanh.pop %v746
    %749 = vrot.lane.b32.xlu0 %v747, 64
    %v750 = vpop.permute.xlu0 %749
    %v752 = vmul.f32 %v733, %v750
    %754 = vrot.lane.b32.xlu0 %v752, 32
    %v755 = vpop.permute.xlu0 %754
    %v756 = vsel %vm249, %v755, 0
    %758 = vmatprep.subr.mxu0 0.0
    %759 = vmatpush1.msra.mxu0 %v245
    %760 = vmatprep.subr.mxu0 0.0
    %761 = vmatpush1.msra.mxu0 %v246
    %762 = vmatprep.subr.mxu0 0.0
    %763 = vmatpush1.msra.mxu0 %v247
    %764 = vmatprep.subr.mxu0 0.0
    %765 = vmatpush1.msra.mxu0 %v248
    %766 = vmatprep.subr.mxu0 0.0
    %767 = vmatpush1.msra.mxu0 0.0
    %768 = vmatprep.subr.mxu0 0.0
    %769 = vmatpush1.msra.mxu0 0.0
    %770 = vmatprep.subr.mxu0 0.0
    %771 = vmatpush1.msra.mxu0 0.0
    %772 = vmatprep.subr.mxu0 0.0
    %773 = vmatpush1.msra.mxu0 0.0
    %774 = vmatprep.subr.mxu0 0.0
    %775 = vmatpush1.msra.mxu0 0.0
    %776 = vmatprep.subr.mxu0 0.0
    %777 = vmatpush1.msra.mxu0 0.0
    %778 = vmatprep.subr.mxu0 0.0
    %779 = vmatpush1.msra.mxu0 0.0
    %780 = vmatprep.subr.mxu0 0.0
    %781 = vmatpush1.msra.mxu0 0.0
    %782 = vmatprep.subr.mxu0 0.0
    %783 = vmatpush1.msra.mxu0 0.0
    %784 = vmatprep.subr.mxu0 0.0
    %785 = vmatpush1.msra.mxu0 0.0
    %786 = vmatprep.subr.mxu0 0.0
    %787 = vmatpush1.msra.mxu0 0.0
    %788 = vmatprep.subr.mxu0 0.0
    %789 = vmatpush1.msra.mxu0 0.0
    %790 = vmatprep.subr.mxu0 0.0
    %791 = vmatpush1.msra.mxu0 0.0
    %792 = vmatprep.subr.mxu0 0.0
    %793 = vmatpush1.msra.mxu0 0.0
    %794 = vmatprep.subr.mxu0 0.0
    %795 = vmatpush1.msra.mxu0 0.0
    %796 = vmatprep.subr.mxu0 0.0
    %797 = vmatpush1.msra.mxu0 0.0
    %798 = vmatprep.subr.mxu0 0.0
    %799 = vmatpush1.msra.mxu0 0.0
    %800 = vmatprep.subr.mxu0 0.0
    %801 = vmatpush1.msra.mxu0 0.0
    %802 = vmatprep.subr.mxu0 0.0
    %803 = vmatpush1.msra.mxu0 0.0
    %804 = vmatprep.subr.mxu0 0.0
    %805 = vmatpush1.msra.mxu0 0.0
    %806 = vmatprep.subr.mxu0 0.0
    %807 = vmatpush1.msra.mxu0 0.0
    %808 = vmatprep.subr.mxu0 0.0
    %809 = vmatpush1.msra.mxu0 0.0
    %810 = vmatprep.subr.mxu0 0.0
    %811 = vmatpush1.msra.mxu0 0.0
    %812 = vmatprep.subr.mxu0 0.0
    %813 = vmatpush1.msra.mxu0 0.0
    %814 = vmatprep.subr.mxu0 0.0
    %815 = vmatpush1.msra.mxu0 0.0
    %816 = vmatprep.subr.mxu0 0.0
    %817 = vmatpush1.msra.mxu0 0.0
    %818 = vmatprep.subr.mxu0 0.0
    %819 = vmatpush1.msra.mxu0 0.0
    %820 = vmatprep.subr.mxu0 0.0
    %821 = vmatpush1.msra.mxu0 0.0
    %822 = vmatprep.mubr.f32.mxu0 0.0
    %823 = vmatmul.mubr.f32.gmra.mrb[0].mxu0 %v756
    %v824 = vpop.f32.mrb[0].mxu0
    %v825 = vadd.f32 0.0, %v824
    %v826 = vpop.f32.mrb[0].mxu0
    %827 = vdwg.mxu0
    %v828 = vadd.f32 %v232, %v825
    %v829 = vxor.u32 %v828, 2147483648
    %v830 = vmul.f32 %v829, 1.442695
    %v831 = vpow.pop %v830
    %v832 = vadd.f32 %v831, 1.0
    %v833 = vrcp.pop %v832
    %v834 = vmul.f32 1.0, %v833
    %v835 = vmul.f32 %v834, 2.0
    %v836 = vsub.f32 %v835, 1.0
    %v837 = vmul.f32 %v834, %v746
    %839 = vrot.lane.b32.xlu0 %v836, 64
    %v840 = vpop.permute.xlu0 %839
    %v842 = vmul.f32 %v834, %v840
    %844 = vrot.lane.b32.xlu0 %v842, 32
    %v845 = vpop.permute.xlu0 %844
    %v847 = vadd.f32 %v837, %v845
    %v848 = vtanh.pop %v847
    %850 = vrot.lane.b32.xlu0 %v848, 64
    %v851 = vpop.permute.xlu0 %850
    %v853 = vmul.f32 %v834, %v851
    %855 = vrot.lane.b32.xlu0 %v853, 32
    %v856 = vpop.permute.xlu0 %855
    %v857 = vsel %vm249, %v856, 0
    %859 = vmatprep.subr.mxu0 0.0
    %860 = vmatpush1.msra.mxu0 %v245
    %861 = vmatprep.subr.mxu0 0.0
    %862 = vmatpush1.msra.mxu0 %v246
    %863 = vmatprep.subr.mxu0 0.0
    %864 = vmatpush1.msra.mxu0 %v247
    %865 = vmatprep.subr.mxu0 0.0
    %866 = vmatpush1.msra.mxu0 %v248
    %867 = vmatprep.subr.mxu0 0.0
    %868 = vmatpush1.msra.mxu0 0.0
    %869 = vmatprep.subr.mxu0 0.0
    %870 = vmatpush1.msra.mxu0 0.0
    %871 = vmatprep.subr.mxu0 0.0
    %872 = vmatpush1.msra.mxu0 0.0
    %873 = vmatprep.subr.mxu0 0.0
    %874 = vmatpush1.msra.mxu0 0.0
    %875 = vmatprep.subr.mxu0 0.0
    %876 = vmatpush1.msra.mxu0 0.0
    %877 = vmatprep.subr.mxu0 0.0
    %878 = vmatpush1.msra.mxu0 0.0
    %879 = vmatprep.subr.mxu0 0.0
    %880 = vmatpush1.msra.mxu0 0.0
    %881 = vmatprep.subr.mxu0 0.0
    %882 = vmatpush1.msra.mxu0 0.0
    %883 = vmatprep.subr.mxu0 0.0
    %884 = vmatpush1.msra.mxu0 0.0
    %885 = vmatprep.subr.mxu0 0.0
    %886 = vmatpush1.msra.mxu0 0.0
    %887 = vmatprep.subr.mxu0 0.0
    %888 = vmatpush1.msra.mxu0 0.0
    %889 = vmatprep.subr.mxu0 0.0
    %890 = vmatpush1.msra.mxu0 0.0
    %891 = vmatprep.subr.mxu0 0.0
    %892 = vmatpush1.msra.mxu0 0.0
    %893 = vmatprep.subr.mxu0 0.0
    %894 = vmatpush1.msra.mxu0 0.0
    %895 = vmatprep.subr.mxu0 0.0
    %896 = vmatpush1.msra.mxu0 0.0
    %897 = vmatprep.subr.mxu0 0.0
    %898 = vmatpush1.msra.mxu0 0.0
    %899 = vmatprep.subr.mxu0 0.0
    %900 = vmatpush1.msra.mxu0 0.0
    %901 = vmatprep.subr.mxu0 0.0
    %902 = vmatpush1.msra.mxu0 0.0
    %903 = vmatprep.subr.mxu0 0.0
    %904 = vmatpush1.msra.mxu0 0.0
    %905 = vmatprep.subr.mxu0 0.0
    %906 = vmatpush1.msra.mxu0 0.0
    %907 = vmatprep.subr.mxu0 0.0
    %908 = vmatpush1.msra.mxu0 0.0
    %909 = vmatprep.subr.mxu0 0.0
    %910 = vmatpush1.msra.mxu0 0.0
    %911 = vmatprep.subr.mxu0 0.0
    %912 = vmatpush1.msra.mxu0 0.0
    %913 = vmatprep.subr.mxu0 0.0
    %914 = vmatpush1.msra.mxu0 0.0
    %915 = vmatprep.subr.mxu0 0.0
    %916 = vmatpush1.msra.mxu0 0.0
    %917 = vmatprep.subr.mxu0 0.0
    %918 = vmatpush1.msra.mxu0 0.0
    %919 = vmatprep.subr.mxu0 0.0
    %920 = vmatpush1.msra.mxu0 0.0
    %921 = vmatprep.subr.mxu0 0.0
    %922 = vmatpush1.msra.mxu0 0.0
    %923 = vmatprep.mubr.f32.mxu0 0.0
    %924 = vmatmul.mubr.f32.gmra.mrb[0].mxu0 %v857
    %v925 = vpop.f32.mrb[0].mxu0
    %v926 = vadd.f32 0.0, %v925
    %v927 = vpop.f32.mrb[0].mxu0
    %928 = vdwg.mxu0
    %v929 = vadd.f32 %v237, %v926
    %v930 = vxor.u32 %v929, 2147483648
    %v931 = vmul.f32 %v930, 1.442695
    %v932 = vpow.pop %v931
    %v933 = vadd.f32 %v932, 1.0
    %v934 = vrcp.pop %v933
    %v935 = vmul.f32 1.0, %v934
    %v936 = vmul.f32 %v935, 2.0
    %v937 = vsub.f32 %v936, 1.0
    %v938 = vmul.f32 %v935, %v847
    %940 = vrot.lane.b32.xlu0 %v937, 64
    %v941 = vpop.permute.xlu0 %940
    %v943 = vmul.f32 %v935, %v941
    %945 = vrot.lane.b32.xlu0 %v943, 32
    %v946 = vpop.permute.xlu0 %945
    %v948 = vadd.f32 %v938, %v946
    %v949 = vtanh.pop %v948
    %951 = vrot.lane.b32.xlu0 %v949, 64
    %v952 = vpop.permute.xlu0 %951
    %v954 = vmul.f32 %v935, %v952
    %956 = vrot.lane.b32.xlu0 %v954, 32
    %v957 = vpop.permute.xlu0 %956
    %v958 = vsel %vm249, %v957, 0
    %960 = vmatprep.subr.mxu0 0.0
    %961 = vmatpush1.msra.mxu0 %v245
    %962 = vmatprep.subr.mxu0 0.0
    %963 = vmatpush1.msra.mxu0 %v246
    %964 = vmatprep.subr.mxu0 0.0
    %965 = vmatpush1.msra.mxu0 %v247
    %966 = vmatprep.subr.mxu0 0.0
    %967 = vmatpush1.msra.mxu0 %v248
    %968 = vmatprep.subr.mxu0 0.0
    %969 = vmatpush1.msra.mxu0 0.0
    %970 = vmatprep.subr.mxu0 0.0
    %971 = vmatpush1.msra.mxu0 0.0
    %972 = vmatprep.subr.mxu0 0.0
    %973 = vmatpush1.msra.mxu0 0.0
    %974 = vmatprep.subr.mxu0 0.0
    %975 = vmatpush1.msra.mxu0 0.0
    %976 = vmatprep.subr.mxu0 0.0
    %977 = vmatpush1.msra.mxu0 0.0
    %978 = vmatprep.subr.mxu0 0.0
    %979 = vmatpush1.msra.mxu0 0.0
    %980 = vmatprep.subr.mxu0 0.0
    %981 = vmatpush1.msra.mxu0 0.0
    %982 = vmatprep.subr.mxu0 0.0
    %983 = vmatpush1.msra.mxu0 0.0
    %984 = vmatprep.subr.mxu0 0.0
    %985 = vmatpush1.msra.mxu0 0.0
    %986 = vmatprep.subr.mxu0 0.0
    %987 = vmatpush1.msra.mxu0 0.0
    %988 = vmatprep.subr.mxu0 0.0
    %989 = vmatpush1.msra.mxu0 0.0
    %990 = vmatprep.subr.mxu0 0.0
    %991 = vmatpush1.msra.mxu0 0.0
    %992 = vmatprep.subr.mxu0 0.0
    %993 = vmatpush1.msra.mxu0 0.0
    %994 = vmatprep.subr.mxu0 0.0
    %995 = vmatpush1.msra.mxu0 0.0
    %996 = vmatprep.subr.mxu0 0.0
    %997 = vmatpush1.msra.mxu0 0.0
    %998 = vmatprep.subr.mxu0 0.0
    %999 = vmatpush1.msra.mxu0 0.0
    %1000 = vmatprep.subr.mxu0 0.0
    %1001 = vmatpush1.msra.mxu0 0.0
    %1002 = vmatprep.subr.mxu0 0.0
    %1003 = vmatpush1.msra.mxu0 0.0
    %1004 = vmatprep.subr.mxu0 0.0
    %1005 = vmatpush1.msra.mxu0 0.0
    %1006 = vmatprep.subr.mxu0 0.0
    %1007 = vmatpush1.msra.mxu0 0.0
    %1008 = vmatprep.subr.mxu0 0.0
    %1009 = vmatpush1.msra.mxu0 0.0
    %1010 = vmatprep.subr.mxu0 0.0
    %1011 = vmatpush1.msra.mxu0 0.0
    %1012 = vmatprep.subr.mxu0 0.0
    %1013 = vmatpush1.msra.mxu0 0.0
    %1014 = vmatprep.subr.mxu0 0.0
    %1015 = vmatpush1.msra.mxu0 0.0
    %1016 = vmatprep.subr.mxu0 0.0
    %1017 = vmatpush1.msra.mxu0 0.0
    %1018 = vmatprep.subr.mxu0 0.0
    %1019 = vmatpush1.msra.mxu0 0.0
    %1020 = vmatprep.subr.mxu0 0.0
    %1021 = vmatpush1.msra.mxu0 0.0
    %1022 = vmatprep.subr.mxu0 0.0
    %1023 = vmatpush1.msra.mxu0 0.0
    %1024 = vmatprep.mubr.f32.mxu0 0.0
    %1025 = vmatmul.mubr.f32.gmra.mrb[0].mxu0 %v958
    %v1026 = vpop.f32.mrb[0].mxu0
    %v1027 = vadd.f32 0.0, %v1026
    %v1028 = vpop.f32.mrb[0].mxu0
    %1029 = vdwg.mxu0
    %v1030 = vadd.f32 %v242, %v1027
    %v1031 = vxor.u32 %v1030, 2147483648
    %v1032 = vmul.f32 %v1031, 1.442695
    %v1033 = vpow.pop %v1032
    %v1034 = vadd.f32 %v1033, 1.0
    %v1035 = vrcp.pop %v1034
    %v1036 = vmul.f32 1.0, %v1035
    %v1037 = vmul.f32 %v1036, 2.0
    %v1038 = vsub.f32 %v1037, 1.0
    %v1039 = vmul.f32 %v1036, %v948
    %1041 = vrot.lane.b32.xlu0 %v1038, 64
    %v1042 = vpop.permute.xlu0 %1041
    %v1044 = vmul.f32 %v1036, %v1042
    %1046 = vrot.lane.b32.xlu0 %v1044, 32
    %v1047 = vpop.permute.xlu0 %1046
    %v1049 = vadd.f32 %v1039, %v1047
    %v1050 = vtanh.pop %v1049
    %1052 = vrot.lane.b32.xlu0 %v1050, 64
    %v1053 = vpop.permute.xlu0 %1052
    %v1055 = vmul.f32 %v1036, %v1053
    %v1056 = vld [vmem:[#allocation5] sm:$0xff]
    %v1057 = vld [vmem:[#allocation5 + $0x8] sm:$0xff]
    %v1058 = vld [vmem:[#allocation5 + $0x10] sm:$0xff]
    %v1059 = vld [vmem:[#allocation5 + $0x18] sm:$0xff]
    %v1060 = vld [vmem:[%s4] sm:$0x1]
    %v1062 = vlaneseq
    %v1063 = vshrl.u32 %v1062, 7
    %v1064 = vsub.s32 0, %v1063
    %v1065 = vrot.slane %v1060, %v1064
    %1068 = vrot.lane.b32.xlu0 %v1055, 32
    %v1069 = vpop.permute.xlu0 %1068
    %v1070 = vsel %vm249, %v1069, 0
    %1072 = vmatprep.subr.mxu0 0.0
    %1073 = vmatpush1.msra.mxu0 %v1056
    %1074 = vmatprep.subr.mxu0 0.0
    %1075 = vmatpush1.msra.mxu0 %v1057
    %1076 = vmatprep.subr.mxu0 0.0
    %1077 = vmatpush1.msra.mxu0 %v1058
    %1078 = vmatprep.subr.mxu0 0.0
    %1079 = vmatpush1.msra.mxu0 %v1059
    %1080 = vmatprep.subr.mxu0 0.0
    %1081 = vmatpush1.msra.mxu0 0.0
    %1082 = vmatprep.subr.mxu0 0.0
    %1083 = vmatpush1.msra.mxu0 0.0
    %1084 = vmatprep.subr.mxu0 0.0
    %1085 = vmatpush1.msra.mxu0 0.0
    %1086 = vmatprep.subr.mxu0 0.0
    %1087 = vmatpush1.msra.mxu0 0.0
    %1088 = vmatprep.subr.mxu0 0.0
    %1089 = vmatpush1.msra.mxu0 0.0
    %1090 = vmatprep.subr.mxu0 0.0
    %1091 = vmatpush1.msra.mxu0 0.0
    %1092 = vmatprep.subr.mxu0 0.0
    %1093 = vmatpush1.msra.mxu0 0.0
    %1094 = vmatprep.subr.mxu0 0.0
    %1095 = vmatpush1.msra.mxu0 0.0
    %1096 = vmatprep.subr.mxu0 0.0
    %1097 = vmatpush1.msra.mxu0 0.0
    %1098 = vmatprep.subr.mxu0 0.0
    %1099 = vmatpush1.msra.mxu0 0.0
    %1100 = vmatprep.subr.mxu0 0.0
    %1101 = vmatpush1.msra.mxu0 0.0
    %1102 = vmatprep.subr.mxu0 0.0
    %1103 = vmatpush1.msra.mxu0 0.0
    %1104 = vmatprep.subr.mxu0 0.0
    %1105 = vmatpush1.msra.mxu0 0.0
    %1106 = vmatprep.subr.mxu0 0.0
    %1107 = vmatpush1.msra.mxu0 0.0
    %1108 = vmatprep.subr.mxu0 0.0
    %1109 = vmatpush1.msra.mxu0 0.0
    %1110 = vmatprep.subr.mxu0 0.0
    %1111 = vmatpush1.msra.mxu0 0.0
    %1112 = vmatprep.subr.mxu0 0.0
    %1113 = vmatpush1.msra.mxu0 0.0
    %1114 = vmatprep.subr.mxu0 0.0
    %1115 = vmatpush1.msra.mxu0 0.0
    %1116 = vmatprep.subr.mxu0 0.0
    %1117 = vmatpush1.msra.mxu0 0.0
    %1118 = vmatprep.subr.mxu0 0.0
    %1119 = vmatpush1.msra.mxu0 0.0
    %1120 = vmatprep.subr.mxu0 0.0
    %1121 = vmatpush1.msra.mxu0 0.0
    %1122 = vmatprep.subr.mxu0 0.0
    %1123 = vmatpush1.msra.mxu0 0.0
    %1124 = vmatprep.subr.mxu0 0.0
    %1125 = vmatpush1.msra.mxu0 0.0
    %1126 = vmatprep.subr.mxu0 0.0
    %1127 = vmatpush1.msra.mxu0 0.0
    %1128 = vmatprep.subr.mxu0 0.0
    %1129 = vmatpush1.msra.mxu0 0.0
    %1130 = vmatprep.subr.mxu0 0.0
    %1131 = vmatpush1.msra.mxu0 0.0
    %1132 = vmatprep.subr.mxu0 0.0
    %1133 = vmatpush1.msra.mxu0 0.0
    %1134 = vmatprep.subr.mxu0 0.0
    %1135 = vmatpush1.msra.mxu0 0.0
    %1136 = vmatprep.mubr.f32.mxu0 0.0
    %1137 = vmatmul.mubr.f32.gmra.mrb[0].mxu0 %v1070
    %v1138 = vpop.f32.mrb[0].mxu0
    %v1139 = vadd.f32 %v1065, %v1138
    %v1140 = vpop.f32.mrb[0].mxu0
    %1141 = vdwg.mxu0
    %1142 = vmax.xlane.f32.xlu0 %v1139
    %v1143 = vpop.xlane.xlu0 %1142
    %v1144 = vsub.f32 %v1139, %v1143
    %v1145 = vmul.f32 %v1144, 1.442695
    %v1146 = vpow.pop %v1145
    %1147 = vadd.xlane.f32.xlu0 %v1146
    %v1148 = vpop.xlane.xlu0 %1147
    %v1149 = vlog2.pop %v1148
    %v1150 = vmul.f32 %v1149, 0.6931472
    %v1151 = vsub.f32 %v1144, %v1150
    %1152 = vst [vmem:[#allocation7] sm:$0xff] %v1151
    // Predicated region
    $region30: #{_forward.1} parent=1 // pred_check
      _
    $region31: #{_forward.1} parent=1 // pred_check_branch
      %1154 = sbr.rel (0) target = $region33
    $region32: #{_forward.1} parent=1 // pred_region
      %s1156 = ssub.s32 128, 128
      %1157 = vsyncadd [#allocation4], %s1156
      %s1159 = sshll.u32 [#allocation7], 4
      %s1160 = int_to_ptr.vmem [resolvable:$true] %s1159
      %1162 = dma.vmem_to_hbm [thread:$0]  %s1160, 128, %s5, [#allocation4]
    $region33: #{_forward.1} parent=1 // pred_fallthru
      _
    // Predicated region
    $region34: #{_forward.1} parent=1 // pred_check
      _
    $region35: #{_forward.1} parent=1 // pred_check_branch
      %1164 = sbr.rel (0) target = $region37
    $region36: #{_forward.1} parent=1 // pred_region
      %1165 = dma.done [#allocation4], 128
    $region37: #{_forward.1} parent=1 // pred_fallthru
      _
    %1166 = vsyncpa [#allocation3], 1
    %1167 = vsyncpa [#allocation6], 1
    %1168 = vsyncpa [#allocation4], 1

</llo_original>
